<compile_context>
chip_gen: v5e
topology: v5e:2x2
jax: 0.10.0
libtpu: 0.0.40
codegen_flags: <defaults>
</compile_context>

<pallas_src>
import jax
import jax.numpy as jnp
from jax.experimental import pallas as pl
from jax.experimental.pallas import tpu as pltpu

BN_EPS = 1e-5


def _round_up(x, m):
    return (x + m - 1) // m * m


def _vmem_budget_bytes():
    # Leave ~8 MiB headroom under physical VMEM per TensorCore (64 MiB on v7x, 128 MiB on
    # v5e/v6e); never request more than 96 MiB.
    try:
        cap = int(pltpu.get_tpu_info().vmem_capacity_bytes)
    except Exception:
        cap = 64 * 1024 * 1024
    return int(min(cap - 8 * 1024 * 1024, 96 * 1024 * 1024))


def _pick_row_tile(H, W, Cin_p, Cout_p, budget_bytes):
    """Largest row tile TH (divisor of H, TH*W a multiple of 16 for bf16 row blocks) whose
    pass-1 working set fits in ~60% of the VMEM budget; prefer >=2 row tiles per image so
    the DMAs actually overlap with compute."""
    def vmem_est(th):
        return (2 * (H + 2) * (W + 2) * Cin_p * 4      # resident padded image (double-buffered)
                + 2 * 9 * Cin_p * Cout_p * 4           # folded weights (double-buffered)
                + 2 * th * W * Cout_p * 2              # bf16 y block (double-buffered)
                + th * W * (9 * Cin_p + Cout_p) * 4    # in-kernel lhs + f32 acc temporaries
                + 8 * Cout_p * 4)                      # per-tile stats blocks
    cands = [d for d in range(H, 0, -1) if H % d == 0 and (d * W) % 16 == 0]
    assert cands, "H*W must be a multiple of 16"
    fitting = [d for d in cands if vmem_est(d) <= int(0.6 * budget_bytes)]
    if not fitting:
        return cands[-1]
    multi = [d for d in fitting if d < H and d * W >= 128]
    return multi[0] if multi else fitting[0]


def conv_block_pallas(x_nchw, w_oihw, gamma, beta, alpha):
    N, Cin, H, W = x_nchw.shape
    Cout = w_oihw.shape[0]
    M = N * H * W

    Cin_p = _round_up(Cin, 8)       # sublane-aligned per-tap channel chunk
    Cout_p = _round_up(Cout, 128)   # lane-dense output channels (MXU rhs / unmasked vst)
    # TODO(synk): for Cout << 128 the lane padding still inflates y/out HBM traffic ~Cout_p/Cout x;
    # a denser (N*H, W*Cout) store layout would fix that at the cost of a per-tile relayout.

    budget = _vmem_budget_bytes()
    TH = _pick_row_tile(H, W, Cin_p, Cout_p, budget)
    n_rt = H // TH

    # ---- glue: NCHW -> padded NHWC (spatial pad 1, channel pad to Cin_p) ----
    # TODO(synk): when ConvBlocks are chained, keep activations NHWC between blocks and fold this
    # pad/transpose (and the final slice/transpose) into the adjacent kernels.
    x_nhwc = jnp.transpose(x_nchw, (0, 2, 3, 1)).astype(jnp.float32)
    x_pad = jnp.pad(x_nhwc, ((0, 0), (1, 1), (1, 1), (0, Cin_p - Cin)))

    # 3x3 weights folded into the contraction dim: (9*Cin_p, Cout_p), zero-padded.
    w_folded = jnp.transpose(w_oihw.astype(jnp.float32), (2, 3, 1, 0)).reshape(9, Cin, Cout)
    w_folded = jnp.pad(w_folded, ((0, 0), (0, Cin_p - Cin), (0, Cout_p - Cout)))
    w_folded = w_folded.reshape(9 * Cin_p, Cout_p)

    # ---------------- pass 1: row-tiled conv (single folded matmul) + channel stats ----------------
    def conv_stats_kernel(x_ref, w_ref, y_ref, psum_ref, psq_ref):
        # x_ref: (1, H+2, W+2, Cin_p) padded image, resident across this image's row tiles
        # w_ref: (9*Cin_p, Cout_p)    y_ref: (TH*W, Cout_p) bf16
        # psum_ref / psq_ref: (1, 1, Cout_p) per-tile channel partials (f32)
        row0 = pl.program_id(1) * TH
        xt = x_ref[0, pl.ds(row0, TH + 2), :, :]            # (TH+2, W+2, Cin_p) halo'd row band
        # Fold the 9 taps into the contraction dim -> one MXU matmul with K = 9*Cin_p.
        lhs = jnp.concatenate(
            [xt[dy:dy + TH, dx:dx + W, :].reshape(TH * W, Cin_p)
             for dy in range(3) for dx in range(3)],
            axis=-1)                                        # (TH*W, 9*Cin_p)
        acc = jnp.dot(lhs, w_ref[...], preferred_element_type=jnp.float32)
        y_ref[...] = acc.astype(y_ref.dtype)                # bf16 write-back (halves HBM traffic)
        # stats from the f32 accumulator (before the bf16 downcast)
        psum_ref[...] = jnp.sum(acc, axis=0).reshape(1, 1, Cout_p)
        psq_ref[...] = jnp.sum(acc * acc, axis=0).reshape(1, 1, Cout_p)

    y, psum, psq = pl.pallas_call(
        conv_stats_kernel,
        out_shape=(
            jax.ShapeDtypeStruct((M, Cout_p), jnp.bfloat16),
            jax.ShapeDtypeStruct((N * n_rt, 1, Cout_p), jnp.float32),
            jax.ShapeDtypeStruct((N * n_rt, 1, Cout_p), jnp.float32),
        ),
        grid_spec=pltpu.PrefetchScalarGridSpec(
            num_scalar_prefetch=0,
            grid=(N, n_rt),
            in_specs=[
                pl.BlockSpec((1, H + 2, W + 2, Cin_p), lambda n, r: (n, 0, 0, 0)),
                pl.BlockSpec((9 * Cin_p, Cout_p), lambda n, r: (0, 0)),
            ],
            out_specs=(
                pl.BlockSpec((TH * W, Cout_p), lambda n, r: (n * n_rt + r, 0)),
                pl.BlockSpec((1, 1, Cout_p), lambda n, r: (n * n_rt + r, 0, 0)),
                pl.BlockSpec((1, 1, Cout_p), lambda n, r: (n * n_rt + r, 0, 0)),
            ),
        ),
        compiler_params=pltpu.CompilerParams(
            dimension_semantics=("parallel", "parallel"),
            vmem_limit_bytes=budget,
        ),
    )(x_pad, w_folded)

    # ---------------- BN fold (tiny, plain JAX): scale/shift from single-pass stats ----------------
    inv_count = 1.0 / float(M)
    tot1 = jnp.sum(psum, axis=(0, 1))                       # (Cout_p,)
    tot2 = jnp.sum(psq, axis=(0, 1))
    mean = tot1 * inv_count
    # Biased variance over N*H*W, as PyTorch BN uses for normalization.
    # TODO(synk): single-pass E[y^2]-mean^2 can cancel when |mean| >> std; fine at activation scales.
    var = jnp.maximum(tot2 * inv_count - mean * mean, 0.0)
    gamma_p = jnp.pad(gamma.astype(jnp.float32), (0, Cout_p - Cout))
    beta_p = jnp.pad(beta.astype(jnp.float32), (0, Cout_p - Cout))
    scale = (gamma_p * jax.lax.rsqrt(var + BN_EPS)).reshape(1, Cout_p)
    shift = beta_p.reshape(1, Cout_p) - mean.reshape(1, Cout_p) * scale
    alpha_p = jnp.pad(alpha.astype(jnp.float32), (0, Cout_p - Cout)).reshape(1, Cout_p)

    # ---------------- pass 2: elementwise folded-BN + PReLU (HBM-roofline kernel) ----------------
    tm = min(2048, M)                                       # fixed large lane-dense tile; cdiv tail

    def bn_prelu_kernel(y_ref, scale_ref, shift_ref, alpha_ref, o_ref):
        z = y_ref[...].astype(jnp.float32) * scale_ref[...] + shift_ref[...]
        o_ref[...] = jnp.where(z >= 0.0, z, alpha_ref[...] * z)

    out_flat = pl.pallas_call(
        bn_prelu_kernel,
        out_shape=jax.ShapeDtypeStruct((M, Cout_p), jnp.float32),
        grid_spec=pltpu.PrefetchScalarGridSpec(
            num_scalar_prefetch=0,
            grid=(pl.cdiv(M, tm),),
            in_specs=[
                pl.BlockSpec((tm, Cout_p), lambda i: (i, 0)),
                pl.BlockSpec((1, Cout_p), lambda i: (0, 0)),
                pl.BlockSpec((1, Cout_p), lambda i: (0, 0)),
                pl.BlockSpec((1, Cout_p), lambda i: (0, 0)),
            ],
            out_specs=pl.BlockSpec((tm, Cout_p), lambda i: (i, 0)),
        ),
        compiler_params=pltpu.CompilerParams(
            dimension_semantics=("parallel",),
            vmem_limit_bytes=budget,
        ),
    )(y, scale, shift, alpha_p)

    # ---- glue: (N*H*W, Cout_p) -> NCHW, drop channel padding ----
    out_nhwc = out_flat.reshape(N, H, W, Cout_p)[..., :Cout]
    return jnp.transpose(out_nhwc, (0, 3, 1, 2))


def conv_block_reference(x_nchw, w_oihw, gamma, beta, alpha):
    """Pure-JAX reference mirroring the PyTorch module (training-mode BN, PReLU)."""
    y = jax.lax.conv_general_dilated(
        x_nchw.astype(jnp.float32), w_oihw.astype(jnp.float32),
        window_strides=(1, 1), padding=((1, 1), (1, 1)),
        dimension_numbers=("NCHW", "OIHW", "NCHW"),
        precision=jax.lax.Precision.HIGHEST)
    mean = jnp.mean(y, axis=(0, 2, 3), keepdims=True)
    var = jnp.mean((y - mean) ** 2, axis=(0, 2, 3), keepdims=True)
    y = (y - mean) * jax.lax.rsqrt(var + BN_EPS)
    y = y * gamma.reshape(1, -1, 1, 1) + beta.reshape(1, -1, 1, 1)
    a = alpha.reshape(1, -1, 1, 1)
    return jnp.where(y >= 0.0, y, a * y)


if __name__ == "__main__":
    # Small shapes consistent with the module.
    N, Cin, Cout, H, W = 2, 4, 8, 16, 16

    key = jax.random.PRNGKey(0)
    kx, kw, kg, kb = jax.random.split(key, 4)

    x = jax.random.normal(kx, (N, Cin, H, W), dtype=jnp.float32)
    # Conv2d weight (bias=False since use_batch_norm=True).
    w = jax.random.normal(kw, (Cout, Cin, 3, 3), dtype=jnp.float32) * 0.1
    # BatchNorm affine params (perturbed from defaults for a non-trivial test).
    gamma = 1.0 + 0.1 * jax.random.normal(kg, (Cout,), dtype=jnp.float32)
    beta = 0.1 * jax.random.normal(kb, (Cout,), dtype=jnp.float32)
    # PReLU per-channel slope, PyTorch default init 0.25.
    alpha = jnp.full((Cout,), 0.25, dtype=jnp.float32)

    # TODO(synk): BatchNorm running_mean/running_var updates (training-time side effect) not modeled.

    out = jax.block_until_ready(conv_block_pallas(x, w, gamma, beta, alpha))
    ref = conv_block_reference(x, w, gamma, beta, alpha)

    assert out.shape == (N, Cout, H, W), out.shape
    # Tolerance loosened for the bf16 conv intermediate (stats/BN math stay f32).
    assert jnp.allclose(out, ref, atol=2e-2, rtol=1e-2), float(jnp.max(jnp.abs(out - ref)))

    print("KERNEL_OK")
</pallas_src>

<mosaic_0001>
module attributes {stable_mosaic.version = 11 : i64} {
  func.func @conv_stats_kernel(%arg0: i32, %arg1: i32, %arg2: memref<1x18x18x8xf32, #tpu.memory_space<vmem>>, %arg3: memref<72x128xf32, #tpu.memory_space<vmem>>, %arg4: memref<128x128xbf16, #tpu.memory_space<vmem>>, %arg5: memref<1x1x128xf32, #tpu.memory_space<vmem>>, %arg6: memref<1x1x128xf32, #tpu.memory_space<vmem>>) attributes {dimension_semantics = [#tpu.dimension_semantics<parallel>, #tpu.dimension_semantics<parallel>], iteration_bounds = array<i64: 2, 2>, scalar_prefetch = 0 : i64, scratch_operands = 0 : i64, tpu.core_type = #tpu.core_type<tc>, window_params = [{transform_indices = @transform_0, window_bounds = array<i64: 1, 18, 18, 8>}, {pipeline_mode = #tpu.pipeline_mode<synchronous>, transform_indices = @transform_1, window_bounds = array<i64: 72, 128>}, {transform_indices = @transform_2, window_bounds = array<i64: 128, 128>}, {transform_indices = @transform_3, window_bounds = array<i64: 1, 1, 128>}, {transform_indices = @transform_4, window_bounds = array<i64: 1, 1, 128>}]} {
    %c8_i32 = arith.constant 8 : i32
    %0 = arith.muli %arg1, %c8_i32 : i32
    %c0 = arith.constant 0 : index
    %1 = arith.index_cast %0 : i32 to index
    %c0_0 = arith.constant 0 : index
    %c0_1 = arith.constant 0 : index
    %2 = vector.load %arg2[%c0, %1, %c0_0, %c0_1] : memref<1x18x18x8xf32, #tpu.memory_space<vmem>>, vector<1x10x18x8xf32>
    %3 = vector.shape_cast %2 : vector<1x10x18x8xf32> to vector<10x18x8xf32>
    %4 = vector.extract_strided_slice %3 {offsets = [0, 0, 0], sizes = [8, 16, 8], strides = [1, 1, 1]} : vector<10x18x8xf32> to vector<8x16x8xf32>
    %5 = vector.shape_cast %4 : vector<8x16x8xf32> to vector<128x8xf32>
    %6 = vector.extract_strided_slice %3 {offsets = [0, 1, 0], sizes = [8, 16, 8], strides = [1, 1, 1]} : vector<10x18x8xf32> to vector<8x16x8xf32>
    %7 = vector.shape_cast %6 : vector<8x16x8xf32> to vector<128x8xf32>
    %8 = vector.extract_strided_slice %3 {offsets = [0, 2, 0], sizes = [8, 16, 8], strides = [1, 1, 1]} : vector<10x18x8xf32> to vector<8x16x8xf32>
    %9 = vector.shape_cast %8 : vector<8x16x8xf32> to vector<128x8xf32>
    %10 = vector.extract_strided_slice %3 {offsets = [1, 0, 0], sizes = [8, 16, 8], strides = [1, 1, 1]} : vector<10x18x8xf32> to vector<8x16x8xf32>
    %11 = vector.shape_cast %10 : vector<8x16x8xf32> to vector<128x8xf32>
    %12 = vector.extract_strided_slice %3 {offsets = [1, 1, 0], sizes = [8, 16, 8], strides = [1, 1, 1]} : vector<10x18x8xf32> to vector<8x16x8xf32>
    %13 = vector.shape_cast %12 : vector<8x16x8xf32> to vector<128x8xf32>
    %14 = vector.extract_strided_slice %3 {offsets = [1, 2, 0], sizes = [8, 16, 8], strides = [1, 1, 1]} : vector<10x18x8xf32> to vector<8x16x8xf32>
    %15 = vector.shape_cast %14 : vector<8x16x8xf32> to vector<128x8xf32>
    %16 = vector.extract_strided_slice %3 {offsets = [2, 0, 0], sizes = [8, 16, 8], strides = [1, 1, 1]} : vector<10x18x8xf32> to vector<8x16x8xf32>
    %17 = vector.shape_cast %16 : vector<8x16x8xf32> to vector<128x8xf32>
    %18 = vector.extract_strided_slice %3 {offsets = [2, 1, 0], sizes = [8, 16, 8], strides = [1, 1, 1]} : vector<10x18x8xf32> to vector<8x16x8xf32>
    %19 = vector.shape_cast %18 : vector<8x16x8xf32> to vector<128x8xf32>
    %20 = vector.extract_strided_slice %3 {offsets = [2, 2, 0], sizes = [8, 16, 8], strides = [1, 1, 1]} : vector<10x18x8xf32> to vector<8x16x8xf32>
    %21 = vector.shape_cast %20 : vector<8x16x8xf32> to vector<128x8xf32>
    %22 = tpu.concatenate %5, %7, %9, %11, %13, %15, %17, %19, %21 in 1 : vector<128x8xf32>, vector<128x8xf32>, vector<128x8xf32>, vector<128x8xf32>, vector<128x8xf32>, vector<128x8xf32>, vector<128x8xf32>, vector<128x8xf32>, vector<128x8xf32> -> vector<128x72xf32>
    %c0_2 = arith.constant 0 : index
    %c0_3 = arith.constant 0 : index
    %23 = vector.load %arg3[%c0_2, %c0_3] : memref<72x128xf32, #tpu.memory_space<vmem>>, vector<72x128xf32>
    %cst = arith.constant dense<0.000000e+00> : vector<128x128xf32>
    %24 = tpu.matmul %22, %23, %cst {dimension_numbers = #tpu.dot_dimension_numbers<[1], [0], [0], [1], [0, 0, 1, 1], [], []>} : vector<128x72xf32>, vector<72x128xf32>, vector<128x128xf32> -> vector<128x128xf32>
    %25 = arith.truncf %24 : vector<128x128xf32> to vector<128x128xbf16>
    %c0_4 = arith.constant 0 : index
    %c0_5 = arith.constant 0 : index
    %26 = vector.load %arg4[%c0_4, %c0_5] : memref<128x128xbf16, #tpu.memory_space<vmem>>, vector<128x128xbf16>
    tpu.vector_store %arg4[%c0_4, %c0_5], %25 {strides = array<i32>} : memref<128x128xbf16, #tpu.memory_space<vmem>>, vector<128x128xbf16>,
    %cst_6 = arith.constant dense<0.000000e+00> : vector<128xf32>
    %27 = vector.multi_reduction <add>, %24, %cst_6 [0] : vector<128x128xf32> to vector<128xf32>
    %28 = vector.shape_cast %27 : vector<128xf32> to vector<1x1x128xf32>
    %c0_7 = arith.constant 0 : index
    %c0_8 = arith.constant 0 : index
    %c0_9 = arith.constant 0 : index
    %29 = vector.load %arg5[%c0_7, %c0_8, %c0_9] : memref<1x1x128xf32, #tpu.memory_space<vmem>>, vector<1x1x128xf32>
    tpu.vector_store %arg5[%c0_7, %c0_8, %c0_9], %28 {strides = array<i32>} : memref<1x1x128xf32, #tpu.memory_space<vmem>>, vector<1x1x128xf32>,
    %30 = arith.mulf %24, %24 : vector<128x128xf32>
    %cst_10 = arith.constant dense<0.000000e+00> : vector<128xf32>
    %31 = vector.multi_reduction <add>, %30, %cst_10 [0] : vector<128x128xf32> to vector<128xf32>
    %32 = vector.shape_cast %31 : vector<128xf32> to vector<1x1x128xf32>
    %c0_11 = arith.constant 0 : index
    %c0_12 = arith.constant 0 : index
    %c0_13 = arith.constant 0 : index
    %33 = vector.load %arg6[%c0_11, %c0_12, %c0_13] : memref<1x1x128xf32, #tpu.memory_space<vmem>>, vector<1x1x128xf32>
    tpu.vector_store %arg6[%c0_11, %c0_12, %c0_13], %32 {strides = array<i32>} : memref<1x1x128xf32, #tpu.memory_space<vmem>>, vector<1x1x128xf32>,
    return
  }
  func.func @transform_0(%arg0: i32, %arg1: i32) -> (i32, i32, i32, i32) {
    %c0_i32 = arith.constant 0 : i32
    %c0_i32_0 = arith.constant 0 : i32
    %c0_i32_1 = arith.constant 0 : i32
    %c0_i32_2 = arith.constant 0 : i32
    return %arg0, %c0_i32, %c0_i32_0, %c0_i32_1 : i32, i32, i32, i32
  }
  func.func @transform_1(%arg0: i32, %arg1: i32) -> (i32, i32) {
    %c0_i32 = arith.constant 0 : i32
    %c0_i32_0 = arith.constant 0 : i32
    %c0_i32_1 = arith.constant 0 : i32
    return %c0_i32, %c0_i32_0 : i32, i32
  }
  func.func @transform_2(%arg0: i32, %arg1: i32) -> (i32, i32) {
    %c2_i32 = arith.constant 2 : i32
    %0 = arith.muli %arg0, %c2_i32 : i32
    %1 = arith.addi %0, %arg1 : i32
    %c0_i32 = arith.constant 0 : i32
    %c0_i32_0 = arith.constant 0 : i32
    return %1, %c0_i32 : i32, i32
  }
  func.func @transform_3(%arg0: i32, %arg1: i32) -> (i32, i32, i32) {
    %c2_i32 = arith.constant 2 : i32
    %0 = arith.muli %arg0, %c2_i32 : i32
    %1 = arith.addi %0, %arg1 : i32
    %c0_i32 = arith.constant 0 : i32
    %c0_i32_0 = arith.constant 0 : i32
    %c0_i32_1 = arith.constant 0 : i32
    return %1, %c0_i32, %c0_i32_0 : i32, i32, i32
  }
  func.func @transform_4(%arg0: i32, %arg1: i32) -> (i32, i32, i32) {
    %c2_i32 = arith.constant 2 : i32
    %0 = arith.muli %arg0, %c2_i32 : i32
    %1 = arith.addi %0, %arg1 : i32
    %c0_i32 = arith.constant 0 : i32
    %c0_i32_0 = arith.constant 0 : i32
    %c0_i32_1 = arith.constant 0 : i32
    return %1, %c0_i32, %c0_i32_0 : i32, i32, i32
  }
}

</mosaic_0001>

<llo_original>
// kernel: tpu_custom_call.1
$region0: #{tpu_custom_call.1}
  #allocation0 [shape = 'u32[]', space=smem, size = 0x4, offset = 0x4, fixed_abs, tag = 'smem constant byte address 0x4 - core index']
  #allocation1 [shape = 'u32[72,128]{1,0:T(1,128)}', space=vmem, size = 0x9000, scoped, tag = 'internal scratch']
  %s0 = inlined_call_operand.vmem [shape: f32[2,18,18,8], index: 0, kind: input, shape index: {}]
  %s1 = inlined_call_operand.vmem [shape: f32[72,128], index: 1, kind: input, shape index: {}]
  %s2 = inlined_call_operand.hbm [shape: bf16[512,128], index: 2, kind: output, shape index: {0}]
  %s3 = inlined_call_operand.hbm [shape: f32[4,1,128], index: 3, kind: output, shape index: {1}]
  %s4 = inlined_call_operand.hbm [shape: f32[4,1,128], index: 4, kind: output, shape index: {2}]
  %5 = xla_tuple %s2, %s3, %s4
  %s6 = sld [smem:[#allocation0]]
  $region57: #{tpu_custom_call.1} parent=0
    _
  %s8 = ssub.s32 1, %s6
  %s9 = scalar_select 0, %s8, %s6
  $region1: #{tpu_custom_call.1} parent=0
    #allocation2 [shape = 'u8[65536]{0}', space=vmem, size = 0x10000, scoped, tag = 'output window, operand 0']
    #allocation3 [shape = 's32[2]{0}', space=sflag, size = 0x8, scoped, tag = 'scoped memory for tpu_custom_call.1']
    #allocation4 [shape = 'u8[1024]{0}', space=vmem, size = 0x400, scoped, tag = 'output window, operand 1']
    #allocation5 [shape = 's32[2]{0}', space=sflag, size = 0x8, scoped, tag = 'scoped memory for tpu_custom_call.1']
    #allocation6 [shape = 'u8[1024]{0}', space=vmem, size = 0x400, scoped, tag = 'output window, operand 2']
    %10 = vsyncpa [#allocation3], 0
    %s11 = scalar_lea.sflag [#allocation3], 1
    %12 = vsyncpa %s11, 0
    %13 = vsyncpa [#allocation5], 0
    %s14 = scalar_lea.sflag [#allocation5], 1
    %15 = vsyncpa %s14, 0
    loop: start=0, step=1, limit=6
    $region2: #{tpu_custom_call.1} parent=1 // loop_pre_header
      _
    $region3: #{tpu_custom_call.1} parent=1 // loop_header
      %s17 = sphi 0, %s21
      %p18 = scmp.ge.s32.totalorder %s17, 6
      %s24 = sphi 0, %s36
      %s25 = sphi 0, %s32
      %s26 = sphi 0, %s24
      %s27 = sphi 0, %s25
      %s28 = sphi 0, %s26
      %s29 = sphi 0, %s27
      %s39 = sphi 0, %s41
      %s42 = sphi 0, %s39
      %s43 = sphi 0, %s42
      %s59 = sphi 0, %s43
      %s63 = sphi 0, %s63
      %s65 = sphi 0, %s63
      %s66 = sphi 0, %s65
      %s80 = sphi 0, %s66
      %s90 = sphi 0, %s92
      %s93 = sphi 0, %s90
      %s94 = sphi 0, %s93
      %s110 = sphi 0, %s94
      %s120 = sphi 0, %s122
      %s123 = sphi 0, %s120
      %s124 = sphi 0, %s123
      %s140 = sphi 0, %s124
      %s150 = sphi 0, %s152
      %s153 = sphi 0, %s150
      %s154 = sphi 0, %s153
      %s170 = sphi 0, %s154
    $region4: #{tpu_custom_call.1} parent=1 // loop_header_branch
      %20 = sbr.rel (%p18) target = $region8
    $region5: #{tpu_custom_call.1} parent=1 // loop_body
      %s22 = ssub.s32 %s17, 1
      %s23 = ssub.s32 %s17, 2
      %s30 = sadd.s32 1, %s25
      %p31 = scmp.ge.s32.totalorder %s30, 2
      %s32 = scalar_select %p31, 0, %s30
      %s33 = sadd.s32 1, %s24
      %s34 = scalar_select %p31, %s33, %s24
      %p35 = scmp.ge.s32.totalorder %s34, 2
      %s36 = scalar_select %p35, 0, %s34
      %s37 = ssub.s32 %s24, %s36
      %p38 = scmp.eq.s32.totalorder %s37, 0
      %s40 = sadd.s32 %s39, 1
      %s41 = scalar_select %p38, %s39, %s40
      %p44 = pneg %p38
      %p45 = scmp.eq.s32.totalorder %s17, 3
      %p46 = por %p44, %p45
      %p47 = scmp.ne.s32.totalorder %s39, %s42
      %p48 = scmp.eq.s32.totalorder %s17, 0
      %p49 = por %p47, %p48
      %p50 = scmp.ne.s32.totalorder %s39, %s42
      %p51 = scmp.eq.s32.totalorder %s22, 3
      %p52 = por %p50, %p51
      %p53 = scmp.ne.s32.totalorder %s42, %s43
      %p54 = scmp.eq.s32.totalorder %s22, 0
      %p55 = por %p53, %p54
      %p56 = scmp.ne.s32.totalorder %s42, %s43
      %p57 = scmp.eq.s32.totalorder %s23, 3
      %p58 = por %p56, %p57
      %p60 = scmp.ne.s32.totalorder %s43, %s59
      %p61 = scmp.eq.s32.totalorder %s23, 0
      %p62 = por %p60, %p61
      %s64 = sadd.s32 %s63, 1
      %p67 = scmp.eq.s32.totalorder %s17, 3
      %p68 = scmp.ne.s32.totalorder %s63, %s65
      %p69 = scmp.eq.s32.totalorder %s17, 0
      %p70 = por %p68, %p69
      %p71 = scmp.ne.s32.totalorder %s63, %s65
      %p72 = scmp.eq.s32.totalorder %s22, 3
      %p73 = por %p71, %p72
      %p74 = scmp.ne.s32.totalorder %s65, %s66
      %p75 = scmp.eq.s32.totalorder %s22, 0
      %p76 = por %p74, %p75
      %p77 = scmp.ne.s32.totalorder %s65, %s66
      %p78 = scmp.eq.s32.totalorder %s23, 3
      %p79 = por %p77, %p78
      %p81 = scmp.ne.s32.totalorder %s66, %s80
      %p82 = scmp.eq.s32.totalorder %s23, 0
      %p83 = por %p81, %p82
      %s84 = smul.u32 %s24, 2
      %s85 = sadd.s32 %s84, %s25
      %s86 = smul.u32 %s36, 2
      %s87 = sadd.s32 %s86, %s32
      %s88 = ssub.s32 %s85, %s87
      %p89 = scmp.eq.s32.totalorder %s88, 0
      %s91 = sadd.s32 %s90, 1
      %s92 = scalar_select %p89, %s90, %s91
      %p95 = pneg %p89
      %p96 = scmp.eq.s32.totalorder %s17, 3
      %p97 = por %p95, %p96
      %p98 = scmp.ne.s32.totalorder %s90, %s93
      %p99 = scmp.eq.s32.totalorder %s17, 0
      %p100 = por %p98, %p99
      %p101 = scmp.ne.s32.totalorder %s90, %s93
      %p102 = scmp.eq.s32.totalorder %s22, 3
      %p103 = por %p101, %p102
      %p104 = scmp.ne.s32.totalorder %s93, %s94
      %p105 = scmp.eq.s32.totalorder %s22, 0
      %p106 = por %p104, %p105
      %p107 = scmp.ne.s32.totalorder %s93, %s94
      %p108 = scmp.eq.s32.totalorder %s23, 3
      %p109 = por %p107, %p108
      %p111 = scmp.ne.s32.totalorder %s94, %s110
      %p112 = scmp.eq.s32.totalorder %s23, 0
      %p113 = por %p111, %p112
      %s114 = smul.u32 %s24, 2
      %s115 = sadd.s32 %s114, %s25
      %s116 = smul.u32 %s36, 2
      %s117 = sadd.s32 %s116, %s32
      %s118 = ssub.s32 %s115, %s117
      %p119 = scmp.eq.s32.totalorder %s118, 0
      %s121 = sadd.s32 %s120, 1
      %s122 = scalar_select %p119, %s120, %s121
      %p125 = pneg %p119
      %p126 = scmp.eq.s32.totalorder %s17, 3
      %p127 = por %p125, %p126
      %p128 = scmp.ne.s32.totalorder %s120, %s123
      %p129 = scmp.eq.s32.totalorder %s17, 0
      %p130 = por %p128, %p129
      %p131 = scmp.ne.s32.totalorder %s120, %s123
      %p132 = scmp.eq.s32.totalorder %s22, 3
      %p133 = por %p131, %p132
      %p134 = scmp.ne.s32.totalorder %s123, %s124
      %p135 = scmp.eq.s32.totalorder %s22, 0
      %p136 = por %p134, %p135
      %p137 = scmp.ne.s32.totalorder %s123, %s124
      %p138 = scmp.eq.s32.totalorder %s23, 3
      %p139 = por %p137, %p138
      %p141 = scmp.ne.s32.totalorder %s124, %s140
      %p142 = scmp.eq.s32.totalorder %s23, 0
      %p143 = por %p141, %p142
      %s144 = smul.u32 %s24, 2
      %s145 = sadd.s32 %s144, %s25
      %s146 = smul.u32 %s36, 2
      %s147 = sadd.s32 %s146, %s32
      %s148 = ssub.s32 %s145, %s147
      %p149 = scmp.eq.s32.totalorder %s148, 0
      %s151 = sadd.s32 %s150, 1
      %s152 = scalar_select %p149, %s150, %s151
      %p155 = pneg %p149
      %p156 = scmp.eq.s32.totalorder %s17, 3
      %p157 = por %p155, %p156
      %p158 = scmp.ne.s32.totalorder %s150, %s153
      %p159 = scmp.eq.s32.totalorder %s17, 0
      %p160 = por %p158, %p159
      %p161 = scmp.ne.s32.totalorder %s150, %s153
      %p162 = scmp.eq.s32.totalorder %s22, 3
      %p163 = por %p161, %p162
      %p164 = scmp.ne.s32.totalorder %s153, %s154
      %p165 = scmp.eq.s32.totalorder %s22, 0
      %p166 = por %p164, %p165
      %p167 = scmp.ne.s32.totalorder %s153, %s154
      %p168 = scmp.eq.s32.totalorder %s23, 3
      %p169 = por %p167, %p168
      %p171 = scmp.ne.s32.totalorder %s154, %s170
      %p172 = scmp.eq.s32.totalorder %s23, 0
      %p173 = por %p171, %p172
      %p174 = scmp.le.s32.totalorder 1, %s17
      %p175 = scmp.lt.s32.totalorder %s17, 5
      %p176 = pnand %p174, %p175
      %p177 = pneg %p176
      // Predicated region
      $region9: #{tpu_custom_call.1} parent=5 // pred_check
        _
      $region10: #{tpu_custom_call.1} parent=5 // pred_check_branch
        %179 = sbr.rel (%p176) target = $region12
      $region11: #{tpu_custom_call.1} parent=5 // pred_region
        %s180 = ssub.s32 %s17, 1
        // Predicated region
        $region13: #{tpu_custom_call.1} parent=11 // pred_check
          %p181 = pneg %p76
        $region14: #{tpu_custom_call.1} parent=11 // pred_check_branch
          %183 = sbr.rel (%p181) target = $region16
        $region15: #{tpu_custom_call.1} parent=11 // pred_region
          _
        $region16: #{tpu_custom_call.1} parent=11 // pred_fallthru
          _
      $region12: #{tpu_custom_call.1} parent=5 // pred_fallthru
        _
      %p184 = scmp.lt.s32.totalorder %s17, 4
      // Predicated region
      $region17: #{tpu_custom_call.1} parent=5 // pred_check
        %p185 = pneg %p184
      $region18: #{tpu_custom_call.1} parent=5 // pred_check_branch
        %187 = sbr.rel (%p185) target = $region20
      $region19: #{tpu_custom_call.1} parent=5 // pred_region
        // Predicated region
        $region21: #{tpu_custom_call.1} parent=19 // pred_check
          %p188 = pneg %p49
        $region22: #{tpu_custom_call.1} parent=19 // pred_check_branch
          %190 = sbr.rel (%p188) target = $region24
        $region23: #{tpu_custom_call.1} parent=19 // pred_region
          %p191 = scmp.lt.s32.totalorder %s24, 1
          %s192 = scalar_select %p191, %s24, 1
          %s193 = smul.addr %s192, 54
          %s194 = smul.addr %s193, 8
          %s195 = scalar_lea.vmem %s0, %s194
        $region24: #{tpu_custom_call.1} parent=19 // pred_fallthru
          _
      $region20: #{tpu_custom_call.1} parent=5 // pred_fallthru
        _
      %p196 = scmp.le.s32.totalorder 1, %s17
      %p197 = scmp.lt.s32.totalorder %s17, 5
      %p198 = pnand %p196, %p197
      %p199 = pneg %p198
      // Predicated region
      $region25: #{tpu_custom_call.1} parent=5 // pred_check
        _
      $region26: #{tpu_custom_call.1} parent=5 // pred_check_branch
        %201 = sbr.rel (%p198) target = $region28
      $region27: #{tpu_custom_call.1} parent=5 // pred_region
        %s202 = ssub.s32 %s17, 1
        %p203 = scmp.lt.s32.totalorder %s26, 1
        %s204 = scalar_select %p203, %s26, 1
        %s205 = smul.addr %s204, 54
        %s206 = smul.addr %s205, 8
        %s207 = scalar_lea.vmem %s0, %s206
        %p208 = pneg %p55
        %p209 = pneg %p52
        %p210 = pneg %p76
        %p211 = pneg %p73
        %p212 = pneg %p106
        %p213 = pneg %p103
        %s214 = sand.u32 %s93, 1
        %s215 = scalar_lea.sflag [#allocation3], %s214
        %s216 = sand.u32 %s93, 1
        %s217 = smul.addr %s216, 64
        %s218 = scalar_lea.vmem [#allocation2], %s217
        %p219 = pneg %p136
        %p220 = pneg %p133
        %s221 = sand.u32 %s22, 1
        %s222 = scalar_lea.sflag [#allocation5], %s221
        %s223 = sand.u32 %s123, 1
        %s224 = scalar_lea.vmem [#allocation4], %s223
        %p225 = pneg %p166
        %p226 = pneg %p163
        %s227 = sand.u32 %s22, 1
        %s228 = scalar_lea.sflag [#allocation5], %s227
        %s229 = sand.u32 %s153, 1
        %s230 = scalar_lea.vmem [#allocation6], %s229
        %p231 = scmp.lt.s32.totalorder %s26, 1
        %s232 = scalar_select %p231, %s26, 1
        %s233 = smul.addr %s232, 54
        %s234 = smul.addr %s233, 8
        %s235 = scalar_lea.vmem %s0, %s234
        %s236 = smul.u32 %s26, 2
        %s237 = sadd.s32 %s236, %s27
        %s238 = smul.u32 16, %s237
        %s239 = smul.u32 %s26, 2
        %s240 = sadd.s32 %s239, %s27
        %s241 = smul.u32 %s26, 2
        %s242 = sadd.s32 %s241, %s27
        %s243 = smul.u32 %s27, 8
        %s244 = smul.u32 %s243, 24
        %s245 = scalar_lea.vmem %s235, %s244
        %v246 = vld [vmem:[%s245] sm:$0xff]
        %v247 = vld [vmem:[%s245 + $0x8] sm:$0xff]
        %v248 = vld [vmem:[%s245 + $0x10] sm:$0x3]
        %v249 = vld [vmem:[%s245 + $0x18] sm:$0xff]
        %v250 = vld [vmem:[%s245 + $0x20] sm:$0xff]
        %v251 = vld [vmem:[%s245 + $0x28] sm:$0x3]
        %v252 = vld [vmem:[%s245 + $0x30] sm:$0xff]
        %v253 = vld [vmem:[%s245 + $0x38] sm:$0xff]
        %v254 = vld [vmem:[%s245 + $0x40] sm:$0x3]
        %v255 = vld [vmem:[%s245 + $0x48] sm:$0xff]
        %v256 = vld [vmem:[%s245 + $0x50] sm:$0xff]
        %v257 = vld [vmem:[%s245 + $0x58] sm:$0x3]
        %v258 = vld [vmem:[%s245 + $0x60] sm:$0xff]
        %v259 = vld [vmem:[%s245 + $0x68] sm:$0xff]
        %v260 = vld [vmem:[%s245 + $0x70] sm:$0x3]
        %v261 = vld [vmem:[%s245 + $0x78] sm:$0xff]
        %v262 = vld [vmem:[%s245 + $0x80] sm:$0xff]
        %v263 = vld [vmem:[%s245 + $0x88] sm:$0x3]
        %v264 = vld [vmem:[%s245 + $0x90] sm:$0xff]
        %v265 = vld [vmem:[%s245 + $0x98] sm:$0xff]
        %v266 = vld [vmem:[%s245 + $0xa0] sm:$0x3]
        %v267 = vld [vmem:[%s245 + $0xa8] sm:$0xff]
        %v268 = vld [vmem:[%s245 + $0xb0] sm:$0xff]
        %v269 = vld [vmem:[%s245 + $0xb8] sm:$0x3]
        %v270 = vld [vmem:[%s245 + $0xc0] sm:$0xff]
        %v271 = vld [vmem:[%s245 + $0xc8] sm:$0xff]
        %v272 = vld [vmem:[%s245 + $0xd0] sm:$0x3]
        %v273 = vld [vmem:[%s245 + $0xd8] sm:$0xff]
        %v274 = vld [vmem:[%s245 + $0xe0] sm:$0xff]
        %v275 = vld [vmem:[%s245 + $0xe8] sm:$0x3]
        %vm300 = vcmask 1046528
        %v301 = vrot.slane %v246, 1
        %v302 = vrot.slane %v247, 1
        %v303 = vsel %vm300, %v301, %v302
        %v304 = vrot.slane %v248, 1
        %v305 = vsel %vm300, %v302, %v304
        %v306 = vrot.slane %v249, 1
        %v307 = vrot.slane %v250, 1
        %v308 = vsel %vm300, %v306, %v307
        %v309 = vrot.slane %v251, 1
        %v310 = vsel %vm300, %v307, %v309
        %v311 = vrot.slane %v252, 1
        %v312 = vrot.slane %v253, 1
        %v313 = vsel %vm300, %v311, %v312
        %v314 = vrot.slane %v254, 1
        %v315 = vsel %vm300, %v312, %v314
        %v316 = vrot.slane %v255, 1
        %v317 = vrot.slane %v256, 1
        %v318 = vsel %vm300, %v316, %v317
        %v319 = vrot.slane %v257, 1
        %v320 = vsel %vm300, %v317, %v319
        %v321 = vrot.slane %v258, 1
        %v322 = vrot.slane %v259, 1
        %v323 = vsel %vm300, %v321, %v322
        %v324 = vrot.slane %v260, 1
        %v325 = vsel %vm300, %v322, %v324
        %v326 = vrot.slane %v261, 1
        %v327 = vrot.slane %v262, 1
        %v328 = vsel %vm300, %v326, %v327
        %v329 = vrot.slane %v263, 1
        %v330 = vsel %vm300, %v327, %v329
        %v331 = vrot.slane %v264, 1
        %v332 = vrot.slane %v265, 1
        %v333 = vsel %vm300, %v331, %v332
        %v334 = vrot.slane %v266, 1
        %v335 = vsel %vm300, %v332, %v334
        %v336 = vrot.slane %v267, 1
        %v337 = vrot.slane %v268, 1
        %v338 = vsel %vm300, %v336, %v337
        %v339 = vrot.slane %v269, 1
        %v340 = vsel %vm300, %v337, %v339
        %vm341 = vcmask 1045504
        %v342 = vrot.slane %v246, 2
        %v343 = vrot.slane %v247, 2
        %v344 = vsel %vm341, %v342, %v343
        %v345 = vrot.slane %v248, 2
        %v346 = vsel %vm341, %v343, %v345
        %v347 = vrot.slane %v249, 2
        %v348 = vrot.slane %v250, 2
        %v349 = vsel %vm341, %v347, %v348
        %v350 = vrot.slane %v251, 2
        %v351 = vsel %vm341, %v348, %v350
        %v352 = vrot.slane %v252, 2
        %v353 = vrot.slane %v253, 2
        %v354 = vsel %vm341, %v352, %v353
        %v355 = vrot.slane %v254, 2
        %v356 = vsel %vm341, %v353, %v355
        %v357 = vrot.slane %v255, 2
        %v358 = vrot.slane %v256, 2
        %v359 = vsel %vm341, %v357, %v358
        %v360 = vrot.slane %v257, 2
        %v361 = vsel %vm341, %v358, %v360
        %v362 = vrot.slane %v258, 2
        %v363 = vrot.slane %v259, 2
        %v364 = vsel %vm341, %v362, %v363
        %v365 = vrot.slane %v260, 2
        %v366 = vsel %vm341, %v363, %v365
        %v367 = vrot.slane %v261, 2
        %v368 = vrot.slane %v262, 2
        %v369 = vsel %vm341, %v367, %v368
        %v370 = vrot.slane %v263, 2
        %v371 = vsel %vm341, %v368, %v370
        %v372 = vrot.slane %v264, 2
        %v373 = vrot.slane %v265, 2
        %v374 = vsel %vm341, %v372, %v373
        %v375 = vrot.slane %v266, 2
        %v376 = vsel %vm341, %v373, %v375
        %v377 = vrot.slane %v267, 2
        %v378 = vrot.slane %v268, 2
        %v379 = vsel %vm341, %v377, %v378
        %v380 = vrot.slane %v269, 2
        %v381 = vsel %vm341, %v378, %v380
        %v385 = vrot.slane %v270, 1
        %v386 = vrot.slane %v271, 1
        %v387 = vsel %vm300, %v385, %v386
        %v388 = vrot.slane %v272, 1
        %v389 = vsel %vm300, %v386, %v388
        %v390 = vrot.slane %v270, 2
        %v391 = vrot.slane %v271, 2
        %v392 = vsel %vm341, %v390, %v391
        %v393 = vrot.slane %v272, 2
        %v394 = vsel %vm341, %v391, %v393
        %v398 = vrot.slane %v273, 1
        %v399 = vrot.slane %v274, 1
        %v400 = vsel %vm300, %v398, %v399
        %v401 = vrot.slane %v275, 1
        %v402 = vsel %vm300, %v399, %v401
        %v403 = vrot.slane %v273, 2
        %v404 = vrot.slane %v274, 2
        %v405 = vsel %vm341, %v403, %v404
        %v406 = vrot.slane %v275, 2
        %v407 = vsel %vm341, %v404, %v406
        %408 = vrot.lane.b32.xlu0 %v303, 8
        %v409 = vpop.permute.xlu0 %408
        %410 = vrot.lane.b32.xlu0 %v305, 8
        %v411 = vpop.permute.xlu0 %410
        %412 = vrot.lane.b32.xlu0 %v308, 8
        %v413 = vpop.permute.xlu0 %412
        %414 = vrot.lane.b32.xlu0 %v310, 8
        %v415 = vpop.permute.xlu0 %414
        %416 = vrot.lane.b32.xlu0 %v313, 8
        %v417 = vpop.permute.xlu0 %416
        %418 = vrot.lane.b32.xlu0 %v315, 8
        %v419 = vpop.permute.xlu0 %418
        %420 = vrot.lane.b32.xlu0 %v318, 8
        %v421 = vpop.permute.xlu0 %420
        %422 = vrot.lane.b32.xlu0 %v320, 8
        %v423 = vpop.permute.xlu0 %422
        %424 = vrot.lane.b32.xlu0 %v323, 8
        %v425 = vpop.permute.xlu0 %424
        %426 = vrot.lane.b32.xlu0 %v325, 8
        %v427 = vpop.permute.xlu0 %426
        %428 = vrot.lane.b32.xlu0 %v328, 8
        %v429 = vpop.permute.xlu0 %428
        %430 = vrot.lane.b32.xlu0 %v330, 8
        %v431 = vpop.permute.xlu0 %430
        %432 = vrot.lane.b32.xlu0 %v333, 8
        %v433 = vpop.permute.xlu0 %432
        %434 = vrot.lane.b32.xlu0 %v335, 8
        %v435 = vpop.permute.xlu0 %434
        %436 = vrot.lane.b32.xlu0 %v338, 8
        %v437 = vpop.permute.xlu0 %436
        %438 = vrot.lane.b32.xlu0 %v340, 8
        %v439 = vpop.permute.xlu0 %438
        %456 = vrot.lane.b32.xlu0 %v344, 16
        %v457 = vpop.permute.xlu0 %456
        %458 = vrot.lane.b32.xlu0 %v346, 16
        %v459 = vpop.permute.xlu0 %458
        %460 = vrot.lane.b32.xlu0 %v349, 16
        %v461 = vpop.permute.xlu0 %460
        %462 = vrot.lane.b32.xlu0 %v351, 16
        %v463 = vpop.permute.xlu0 %462
        %464 = vrot.lane.b32.xlu0 %v354, 16
        %v465 = vpop.permute.xlu0 %464
        %466 = vrot.lane.b32.xlu0 %v356, 16
        %v467 = vpop.permute.xlu0 %466
        %468 = vrot.lane.b32.xlu0 %v359, 16
        %v469 = vpop.permute.xlu0 %468
        %470 = vrot.lane.b32.xlu0 %v361, 16
        %v471 = vpop.permute.xlu0 %470
        %472 = vrot.lane.b32.xlu0 %v364, 16
        %v473 = vpop.permute.xlu0 %472
        %474 = vrot.lane.b32.xlu0 %v366, 16
        %v475 = vpop.permute.xlu0 %474
        %476 = vrot.lane.b32.xlu0 %v369, 16
        %v477 = vpop.permute.xlu0 %476
        %478 = vrot.lane.b32.xlu0 %v371, 16
        %v479 = vpop.permute.xlu0 %478
        %480 = vrot.lane.b32.xlu0 %v374, 16
        %v481 = vpop.permute.xlu0 %480
        %482 = vrot.lane.b32.xlu0 %v376, 16
        %v483 = vpop.permute.xlu0 %482
        %484 = vrot.lane.b32.xlu0 %v379, 16
        %v485 = vpop.permute.xlu0 %484
        %486 = vrot.lane.b32.xlu0 %v381, 16
        %v487 = vpop.permute.xlu0 %486
        %504 = vrot.lane.b32.xlu0 %v249, 24
        %v505 = vpop.permute.xlu0 %504
        %506 = vrot.lane.b32.xlu0 %v250, 24
        %v507 = vpop.permute.xlu0 %506
        %508 = vrot.lane.b32.xlu0 %v252, 24
        %v509 = vpop.permute.xlu0 %508
        %510 = vrot.lane.b32.xlu0 %v253, 24
        %v511 = vpop.permute.xlu0 %510
        %512 = vrot.lane.b32.xlu0 %v255, 24
        %v513 = vpop.permute.xlu0 %512
        %514 = vrot.lane.b32.xlu0 %v256, 24
        %v515 = vpop.permute.xlu0 %514
        %516 = vrot.lane.b32.xlu0 %v258, 24
        %v517 = vpop.permute.xlu0 %516
        %518 = vrot.lane.b32.xlu0 %v259, 24
        %v519 = vpop.permute.xlu0 %518
        %520 = vrot.lane.b32.xlu0 %v261, 24
        %v521 = vpop.permute.xlu0 %520
        %522 = vrot.lane.b32.xlu0 %v262, 24
        %v523 = vpop.permute.xlu0 %522
        %524 = vrot.lane.b32.xlu0 %v264, 24
        %v525 = vpop.permute.xlu0 %524
        %526 = vrot.lane.b32.xlu0 %v265, 24
        %v527 = vpop.permute.xlu0 %526
        %528 = vrot.lane.b32.xlu0 %v267, 24
        %v529 = vpop.permute.xlu0 %528
        %530 = vrot.lane.b32.xlu0 %v268, 24
        %v531 = vpop.permute.xlu0 %530
        %532 = vrot.lane.b32.xlu0 %v270, 24
        %v533 = vpop.permute.xlu0 %532
        %534 = vrot.lane.b32.xlu0 %v271, 24
        %v535 = vpop.permute.xlu0 %534
        %552 = vrot.lane.b32.xlu0 %v308, 32
        %v553 = vpop.permute.xlu0 %552
        %554 = vrot.lane.b32.xlu0 %v310, 32
        %v555 = vpop.permute.xlu0 %554
        %556 = vrot.lane.b32.xlu0 %v313, 32
        %v557 = vpop.permute.xlu0 %556
        %558 = vrot.lane.b32.xlu0 %v315, 32
        %v559 = vpop.permute.xlu0 %558
        %560 = vrot.lane.b32.xlu0 %v318, 32
        %v561 = vpop.permute.xlu0 %560
        %562 = vrot.lane.b32.xlu0 %v320, 32
        %v563 = vpop.permute.xlu0 %562
        %564 = vrot.lane.b32.xlu0 %v323, 32
        %v565 = vpop.permute.xlu0 %564
        %566 = vrot.lane.b32.xlu0 %v325, 32
        %v567 = vpop.permute.xlu0 %566
        %568 = vrot.lane.b32.xlu0 %v328, 32
        %v569 = vpop.permute.xlu0 %568
        %570 = vrot.lane.b32.xlu0 %v330, 32
        %v571 = vpop.permute.xlu0 %570
        %572 = vrot.lane.b32.xlu0 %v333, 32
        %v573 = vpop.permute.xlu0 %572
        %574 = vrot.lane.b32.xlu0 %v335, 32
        %v575 = vpop.permute.xlu0 %574
        %576 = vrot.lane.b32.xlu0 %v338, 32
        %v577 = vpop.permute.xlu0 %576
        %578 = vrot.lane.b32.xlu0 %v340, 32
        %v579 = vpop.permute.xlu0 %578
        %580 = vrot.lane.b32.xlu0 %v387, 32
        %v581 = vpop.permute.xlu0 %580
        %582 = vrot.lane.b32.xlu0 %v389, 32
        %v583 = vpop.permute.xlu0 %582
        %600 = vrot.lane.b32.xlu0 %v349, 40
        %v601 = vpop.permute.xlu0 %600
        %602 = vrot.lane.b32.xlu0 %v351, 40
        %v603 = vpop.permute.xlu0 %602
        %604 = vrot.lane.b32.xlu0 %v354, 40
        %v605 = vpop.permute.xlu0 %604
        %606 = vrot.lane.b32.xlu0 %v356, 40
        %v607 = vpop.permute.xlu0 %606
        %608 = vrot.lane.b32.xlu0 %v359, 40
        %v609 = vpop.permute.xlu0 %608
        %610 = vrot.lane.b32.xlu0 %v361, 40
        %v611 = vpop.permute.xlu0 %610
        %612 = vrot.lane.b32.xlu0 %v364, 40
        %v613 = vpop.permute.xlu0 %612
        %614 = vrot.lane.b32.xlu0 %v366, 40
        %v615 = vpop.permute.xlu0 %614
        %616 = vrot.lane.b32.xlu0 %v369, 40
        %v617 = vpop.permute.xlu0 %616
        %618 = vrot.lane.b32.xlu0 %v371, 40
        %v619 = vpop.permute.xlu0 %618
        %620 = vrot.lane.b32.xlu0 %v374, 40
        %v621 = vpop.permute.xlu0 %620
        %622 = vrot.lane.b32.xlu0 %v376, 40
        %v623 = vpop.permute.xlu0 %622
        %624 = vrot.lane.b32.xlu0 %v379, 40
        %v625 = vpop.permute.xlu0 %624
        %626 = vrot.lane.b32.xlu0 %v381, 40
        %v627 = vpop.permute.xlu0 %626
        %628 = vrot.lane.b32.xlu0 %v392, 40
        %v629 = vpop.permute.xlu0 %628
        %630 = vrot.lane.b32.xlu0 %v394, 40
        %v631 = vpop.permute.xlu0 %630
        %648 = vrot.lane.b32.xlu0 %v252, 48
        %v649 = vpop.permute.xlu0 %648
        %650 = vrot.lane.b32.xlu0 %v253, 48
        %v651 = vpop.permute.xlu0 %650
        %652 = vrot.lane.b32.xlu0 %v255, 48
        %v653 = vpop.permute.xlu0 %652
        %654 = vrot.lane.b32.xlu0 %v256, 48
        %v655 = vpop.permute.xlu0 %654
        %656 = vrot.lane.b32.xlu0 %v258, 48
        %v657 = vpop.permute.xlu0 %656
        %658 = vrot.lane.b32.xlu0 %v259, 48
        %v659 = vpop.permute.xlu0 %658
        %660 = vrot.lane.b32.xlu0 %v261, 48
        %v661 = vpop.permute.xlu0 %660
        %662 = vrot.lane.b32.xlu0 %v262, 48
        %v663 = vpop.permute.xlu0 %662
        %664 = vrot.lane.b32.xlu0 %v264, 48
        %v665 = vpop.permute.xlu0 %664
        %666 = vrot.lane.b32.xlu0 %v265, 48
        %v667 = vpop.permute.xlu0 %666
        %668 = vrot.lane.b32.xlu0 %v267, 48
        %v669 = vpop.permute.xlu0 %668
        %670 = vrot.lane.b32.xlu0 %v268, 48
        %v671 = vpop.permute.xlu0 %670
        %672 = vrot.lane.b32.xlu0 %v270, 48
        %v673 = vpop.permute.xlu0 %672
        %674 = vrot.lane.b32.xlu0 %v271, 48
        %v675 = vpop.permute.xlu0 %674
        %676 = vrot.lane.b32.xlu0 %v273, 48
        %v677 = vpop.permute.xlu0 %676
        %678 = vrot.lane.b32.xlu0 %v274, 48
        %v679 = vpop.permute.xlu0 %678
        %696 = vrot.lane.b32.xlu0 %v313, 56
        %v697 = vpop.permute.xlu0 %696
        %698 = vrot.lane.b32.xlu0 %v315, 56
        %v699 = vpop.permute.xlu0 %698
        %700 = vrot.lane.b32.xlu0 %v318, 56
        %v701 = vpop.permute.xlu0 %700
        %702 = vrot.lane.b32.xlu0 %v320, 56
        %v703 = vpop.permute.xlu0 %702
        %704 = vrot.lane.b32.xlu0 %v323, 56
        %v705 = vpop.permute.xlu0 %704
        %706 = vrot.lane.b32.xlu0 %v325, 56
        %v707 = vpop.permute.xlu0 %706
        %708 = vrot.lane.b32.xlu0 %v328, 56
        %v709 = vpop.permute.xlu0 %708
        %710 = vrot.lane.b32.xlu0 %v330, 56
        %v711 = vpop.permute.xlu0 %710
        %712 = vrot.lane.b32.xlu0 %v333, 56
        %v713 = vpop.permute.xlu0 %712
        %714 = vrot.lane.b32.xlu0 %v335, 56
        %v715 = vpop.permute.xlu0 %714
        %716 = vrot.lane.b32.xlu0 %v338, 56
        %v717 = vpop.permute.xlu0 %716
        %718 = vrot.lane.b32.xlu0 %v340, 56
        %v719 = vpop.permute.xlu0 %718
        %720 = vrot.lane.b32.xlu0 %v387, 56
        %v721 = vpop.permute.xlu0 %720
        %722 = vrot.lane.b32.xlu0 %v389, 56
        %v723 = vpop.permute.xlu0 %722
        %724 = vrot.lane.b32.xlu0 %v400, 56
        %v725 = vpop.permute.xlu0 %724
        %726 = vrot.lane.b32.xlu0 %v402, 56
        %v727 = vpop.permute.xlu0 %726
        %744 = vrot.lane.b32.xlu0 %v354, 64
        %v745 = vpop.permute.xlu0 %744
        %746 = vrot.lane.b32.xlu0 %v356, 64
        %v747 = vpop.permute.xlu0 %746
        %748 = vrot.lane.b32.xlu0 %v359, 64
        %v749 = vpop.permute.xlu0 %748
        %750 = vrot.lane.b32.xlu0 %v361, 64
        %v751 = vpop.permute.xlu0 %750
        %752 = vrot.lane.b32.xlu0 %v364, 64
        %v753 = vpop.permute.xlu0 %752
        %754 = vrot.lane.b32.xlu0 %v366, 64
        %v755 = vpop.permute.xlu0 %754
        %756 = vrot.lane.b32.xlu0 %v369, 64
        %v757 = vpop.permute.xlu0 %756
        %758 = vrot.lane.b32.xlu0 %v371, 64
        %v759 = vpop.permute.xlu0 %758
        %760 = vrot.lane.b32.xlu0 %v374, 64
        %v761 = vpop.permute.xlu0 %760
        %762 = vrot.lane.b32.xlu0 %v376, 64
        %v763 = vpop.permute.xlu0 %762
        %764 = vrot.lane.b32.xlu0 %v379, 64
        %v765 = vpop.permute.xlu0 %764
        %766 = vrot.lane.b32.xlu0 %v381, 64
        %v767 = vpop.permute.xlu0 %766
        %768 = vrot.lane.b32.xlu0 %v392, 64
        %v769 = vpop.permute.xlu0 %768
        %770 = vrot.lane.b32.xlu0 %v394, 64
        %v771 = vpop.permute.xlu0 %770
        %772 = vrot.lane.b32.xlu0 %v405, 64
        %v773 = vpop.permute.xlu0 %772
        %774 = vrot.lane.b32.xlu0 %v407, 64
        %v775 = vpop.permute.xlu0 %774
        %vm792 = vcmask 64512
        %v793 = vsel %vm792, %v246, %v409
        %v794 = vsel %vm792, %v247, %v411
        %v795 = vsel %vm792, %v249, %v413
        %v796 = vsel %vm792, %v250, %v415
        %v797 = vsel %vm792, %v252, %v417
        %v798 = vsel %vm792, %v253, %v419
        %v799 = vsel %vm792, %v255, %v421
        %v800 = vsel %vm792, %v256, %v423
        %v801 = vsel %vm792, %v258, %v425
        %v802 = vsel %vm792, %v259, %v427
        %v803 = vsel %vm792, %v261, %v429
        %v804 = vsel %vm792, %v262, %v431
        %v805 = vsel %vm792, %v264, %v433
        %v806 = vsel %vm792, %v265, %v435
        %v807 = vsel %vm792, %v267, %v437
        %v808 = vsel %vm792, %v268, %v439
        %vm809 = vcmask 130048
        %v810 = vsel %vm809, %v793, %v457
        %v811 = vsel %vm809, %v794, %v459
        %v812 = vsel %vm809, %v795, %v461
        %v813 = vsel %vm809, %v796, %v463
        %v814 = vsel %vm809, %v797, %v465
        %v815 = vsel %vm809, %v798, %v467
        %v816 = vsel %vm809, %v799, %v469
        %v817 = vsel %vm809, %v800, %v471
        %v818 = vsel %vm809, %v801, %v473
        %v819 = vsel %vm809, %v802, %v475
        %v820 = vsel %vm809, %v803, %v477
        %v821 = vsel %vm809, %v804, %v479
        %v822 = vsel %vm809, %v805, %v481
        %v823 = vsel %vm809, %v806, %v483
        %v824 = vsel %vm809, %v807, %v485
        %v825 = vsel %vm809, %v808, %v487
        %vm826 = vcmask 195584
        %v827 = vsel %vm826, %v810, %v505
        %v828 = vsel %vm826, %v811, %v507
        %v829 = vsel %vm826, %v812, %v509
        %v830 = vsel %vm826, %v813, %v511
        %v831 = vsel %vm826, %v814, %v513
        %v832 = vsel %vm826, %v815, %v515
        %v833 = vsel %vm826, %v816, %v517
        %v834 = vsel %vm826, %v817, %v519
        %v835 = vsel %vm826, %v818, %v521
        %v836 = vsel %vm826, %v819, %v523
        %v837 = vsel %vm826, %v820, %v525
        %v838 = vsel %vm826, %v821, %v527
        %v839 = vsel %vm826, %v822, %v529
        %v840 = vsel %vm826, %v823, %v531
        %v841 = vsel %vm826, %v824, %v533
        %v842 = vsel %vm826, %v825, %v535
        %vm843 = vcmask 261120
        %v844 = vsel %vm843, %v827, %v553
        %v845 = vsel %vm843, %v828, %v555
        %v846 = vsel %vm843, %v829, %v557
        %v847 = vsel %vm843, %v830, %v559
        %v848 = vsel %vm843, %v831, %v561
        %v849 = vsel %vm843, %v832, %v563
        %v850 = vsel %vm843, %v833, %v565
        %v851 = vsel %vm843, %v834, %v567
        %v852 = vsel %vm843, %v835, %v569
        %v853 = vsel %vm843, %v836, %v571
        %v854 = vsel %vm843, %v837, %v573
        %v855 = vsel %vm843, %v838, %v575
        %v856 = vsel %vm843, %v839, %v577
        %v857 = vsel %vm843, %v840, %v579
        %v858 = vsel %vm843, %v841, %v581
        %v859 = vsel %vm843, %v842, %v583
        %vm860 = vcmask 326656
        %v861 = vsel %vm860, %v844, %v601
        %v862 = vsel %vm860, %v845, %v603
        %v863 = vsel %vm860, %v846, %v605
        %v864 = vsel %vm860, %v847, %v607
        %v865 = vsel %vm860, %v848, %v609
        %v866 = vsel %vm860, %v849, %v611
        %v867 = vsel %vm860, %v850, %v613
        %v868 = vsel %vm860, %v851, %v615
        %v869 = vsel %vm860, %v852, %v617
        %v870 = vsel %vm860, %v853, %v619
        %v871 = vsel %vm860, %v854, %v621
        %v872 = vsel %vm860, %v855, %v623
        %v873 = vsel %vm860, %v856, %v625
        %v874 = vsel %vm860, %v857, %v627
        %v875 = vsel %vm860, %v858, %v629
        %v876 = vsel %vm860, %v859, %v631
        %vm877 = vcmask 392192
        %v878 = vsel %vm877, %v861, %v649
        %v879 = vsel %vm877, %v862, %v651
        %v880 = vsel %vm877, %v863, %v653
        %v881 = vsel %vm877, %v864, %v655
        %v882 = vsel %vm877, %v865, %v657
        %v883 = vsel %vm877, %v866, %v659
        %v884 = vsel %vm877, %v867, %v661
        %v885 = vsel %vm877, %v868, %v663
        %v886 = vsel %vm877, %v869, %v665
        %v887 = vsel %vm877, %v870, %v667
        %v888 = vsel %vm877, %v871, %v669
        %v889 = vsel %vm877, %v872, %v671
        %v890 = vsel %vm877, %v873, %v673
        %v891 = vsel %vm877, %v874, %v675
        %v892 = vsel %vm877, %v875, %v677
        %v893 = vsel %vm877, %v876, %v679
        %vm894 = vcmask 457728
        %v895 = vsel %vm894, %v878, %v697
        %v896 = vsel %vm894, %v879, %v699
        %v897 = vsel %vm894, %v880, %v701
        %v898 = vsel %vm894, %v881, %v703
        %v899 = vsel %vm894, %v882, %v705
        %v900 = vsel %vm894, %v883, %v707
        %v901 = vsel %vm894, %v884, %v709
        %v902 = vsel %vm894, %v885, %v711
        %v903 = vsel %vm894, %v886, %v713
        %v904 = vsel %vm894, %v887, %v715
        %v905 = vsel %vm894, %v888, %v717
        %v906 = vsel %vm894, %v889, %v719
        %v907 = vsel %vm894, %v890, %v721
        %v908 = vsel %vm894, %v891, %v723
        %v909 = vsel %vm894, %v892, %v725
        %v910 = vsel %vm894, %v893, %v727
        %vm911 = vcmask 523264
        %v912 = vsel %vm911, %v895, %v745
        %v913 = vsel %vm911, %v896, %v747
        %v914 = vsel %vm911, %v897, %v749
        %v915 = vsel %vm911, %v898, %v751
        %v916 = vsel %vm911, %v899, %v753
        %v917 = vsel %vm911, %v900, %v755
        %v918 = vsel %vm911, %v901, %v757
        %v919 = vsel %vm911, %v902, %v759
        %v920 = vsel %vm911, %v903, %v761
        %v921 = vsel %vm911, %v904, %v763
        %v922 = vsel %vm911, %v905, %v765
        %v923 = vsel %vm911, %v906, %v767
        %v924 = vsel %vm911, %v907, %v769
        %v925 = vsel %vm911, %v908, %v771
        %v926 = vsel %vm911, %v909, %v773
        %v927 = vsel %vm911, %v910, %v775
        %v928 = vld [vmem:[%s1] sm:$0xff]
        %v929 = vld [vmem:[%s1 + $0x8] sm:$0xff]
        %v930 = vld [vmem:[%s1 + $0x10] sm:$0xff]
        %v931 = vld [vmem:[%s1 + $0x18] sm:$0xff]
        %v932 = vld [vmem:[%s1 + $0x20] sm:$0xff]
        %v933 = vld [vmem:[%s1 + $0x28] sm:$0xff]
        %v934 = vld [vmem:[%s1 + $0x30] sm:$0xff]
        %v935 = vld [vmem:[%s1 + $0x38] sm:$0xff]
        %v936 = vld [vmem:[%s1 + $0x40] sm:$0xff]
        %vm937 = vcmask 588800
        %v939 = vsel %vm937, %v912, 0
        %v942 = vsel %vm937, %v913, 0
        %v945 = vsel %vm937, %v914, 0
        %v948 = vsel %vm937, %v915, 0
        %v951 = vsel %vm937, %v916, 0
        %v954 = vsel %vm937, %v917, 0
        %v957 = vsel %vm937, %v918, 0
        %v960 = vsel %vm937, %v919, 0
        %v963 = vsel %vm937, %v920, 0
        %v966 = vsel %vm937, %v921, 0
        %v969 = vsel %vm937, %v922, 0
        %v972 = vsel %vm937, %v923, 0
        %v975 = vsel %vm937, %v924, 0
        %v978 = vsel %vm937, %v925, 0
        %v981 = vsel %vm937, %v926, 0
        %v984 = vsel %vm937, %v927, 0
        %986 = vmatpush.msra.mxu0 0.0
        %987 = vmatpush.msra.mxu0 0.0
        %988 = vmatpush.msra.mxu0 0.0
        %989 = vmatpush.msra.mxu0 0.0
        %990 = vmatpush.msra.mxu0 0.0
        %991 = vmatpush.msra.mxu0 0.0
        %992 = vmatpush.msra.mxu0 0.0
        %993 = vmatpush.msra.mxu0 %v936
        %994 = vmatpush.msra.mxu0 %v935
        %995 = vmatpush.msra.mxu0 %v934
        %996 = vmatpush.msra.mxu0 %v933
        %997 = vmatpush.msra.mxu0 %v932
        %998 = vmatpush.msra.mxu0 %v931
        %999 = vmatpush.msra.mxu0 %v930
        %1000 = vmatpush.msra.mxu0 %v929
        %1001 = vmatpush.msra.mxu0 %v928
        %1002 = vmatmul.f32.gmra.mxu0 %v939
        %v1003 = vpop.f32.mrf.mxu0
        %v1004 = vadd.f32 0.0, %v1003
        %1005 = vmatmul.f32.gmra.mxu0 %v942
        %v1006 = vpop.f32.mrf.mxu0
        %v1007 = vadd.f32 0.0, %v1006
        %1008 = vmatmul.f32.gmra.mxu0 %v945
        %v1009 = vpop.f32.mrf.mxu0
        %v1010 = vadd.f32 0.0, %v1009
        %1011 = vmatmul.f32.gmra.mxu0 %v948
        %v1012 = vpop.f32.mrf.mxu0
        %v1013 = vadd.f32 0.0, %v1012
        %1014 = vmatmul.f32.gmra.mxu0 %v951
        %v1015 = vpop.f32.mrf.mxu0
        %v1016 = vadd.f32 0.0, %v1015
        %1017 = vmatmul.f32.gmra.mxu0 %v954
        %v1018 = vpop.f32.mrf.mxu0
        %v1019 = vadd.f32 0.0, %v1018
        %1020 = vmatmul.f32.gmra.mxu0 %v957
        %v1021 = vpop.f32.mrf.mxu0
        %v1022 = vadd.f32 0.0, %v1021
        %1023 = vmatmul.f32.gmra.mxu0 %v960
        %v1024 = vpop.f32.mrf.mxu0
        %v1025 = vadd.f32 0.0, %v1024
        %1026 = vmatmul.f32.gmra.mxu0 %v963
        %v1027 = vpop.f32.mrf.mxu0
        %v1028 = vadd.f32 0.0, %v1027
        %1029 = vmatmul.f32.gmra.mxu0 %v966
        %v1030 = vpop.f32.mrf.mxu0
        %v1031 = vadd.f32 0.0, %v1030
        %1032 = vmatmul.f32.gmra.mxu0 %v969
        %v1033 = vpop.f32.mrf.mxu0
        %v1034 = vadd.f32 0.0, %v1033
        %1035 = vmatmul.f32.gmra.mxu0 %v972
        %v1036 = vpop.f32.mrf.mxu0
        %v1037 = vadd.f32 0.0, %v1036
        %1038 = vmatmul.f32.gmra.mxu0 %v975
        %v1039 = vpop.f32.mrf.mxu0
        %v1040 = vadd.f32 0.0, %v1039
        %1041 = vmatmul.f32.gmra.mxu0 %v978
        %v1042 = vpop.f32.mrf.mxu0
        %v1043 = vadd.f32 0.0, %v1042
        %1044 = vmatmul.f32.gmra.mxu0 %v981
        %v1045 = vpop.f32.mrf.mxu0
        %v1046 = vadd.f32 0.0, %v1045
        %1047 = vmatmul.f32.gmra.mxu0 %v984
        %v1048 = vpop.f32.mrf.mxu0
        %v1049 = vadd.f32 0.0, %v1048
        %1050 = vdwg.mxu0
        %v1051 = vpack.c.bf16 %v1004, %v1004
        %v1052 = vpack.c.bf16 %v1007, %v1007
        %v1053 = vpack.c.bf16 %v1010, %v1010
        %v1054 = vpack.c.bf16 %v1013, %v1013
        %v1055 = vpack.c.bf16 %v1016, %v1016
        %v1056 = vpack.c.bf16 %v1019, %v1019
        %v1057 = vpack.c.bf16 %v1022, %v1022
        %v1058 = vpack.c.bf16 %v1025, %v1025
        %v1059 = vpack.c.bf16 %v1028, %v1028
        %v1060 = vpack.c.bf16 %v1031, %v1031
        %v1061 = vpack.c.bf16 %v1034, %v1034
        %v1062 = vpack.c.bf16 %v1037, %v1037
        %v1063 = vpack.c.bf16 %v1040, %v1040
        %v1064 = vpack.c.bf16 %v1043, %v1043
        %v1065 = vpack.c.bf16 %v1046, %v1046
        %v1066 = vpack.c.bf16 %v1049, %v1049
        %1067 = vst [vmem:[%s218] sm:$0xf] %v1051
        %1068 = vst [vmem:[%s218 + $0x4] sm:$0xf] %v1052
        %1069 = vst [vmem:[%s218 + $0x8] sm:$0xf] %v1053
        %1070 = vst [vmem:[%s218 + $0xc] sm:$0xf] %v1054
        %1071 = vst [vmem:[%s218 + $0x10] sm:$0xf] %v1055
        %1072 = vst [vmem:[%s218 + $0x14] sm:$0xf] %v1056
        %1073 = vst [vmem:[%s218 + $0x18] sm:$0xf] %v1057
        %1074 = vst [vmem:[%s218 + $0x1c] sm:$0xf] %v1058
        %1075 = vst [vmem:[%s218 + $0x20] sm:$0xf] %v1059
        %1076 = vst [vmem:[%s218 + $0x24] sm:$0xf] %v1060
        %1077 = vst [vmem:[%s218 + $0x28] sm:$0xf] %v1061
        %1078 = vst [vmem:[%s218 + $0x2c] sm:$0xf] %v1062
        %1079 = vst [vmem:[%s218 + $0x30] sm:$0xf] %v1063
        %1080 = vst [vmem:[%s218 + $0x34] sm:$0xf] %v1064
        %1081 = vst [vmem:[%s218 + $0x38] sm:$0xf] %v1065
        %1082 = vst [vmem:[%s218 + $0x3c] sm:$0xf] %v1066
        %v1083 = vadd.f32 %v1004, %v1007
        %v1084 = vadd.f32 %v1083, %v1010
        %v1085 = vadd.f32 %v1084, %v1013
        %v1086 = vadd.f32 %v1085, %v1016
        %v1087 = vadd.f32 %v1086, %v1019
        %v1088 = vadd.f32 %v1087, %v1022
        %v1089 = vadd.f32 %v1088, %v1025
        %v1090 = vadd.f32 %v1089, %v1028
        %v1091 = vadd.f32 %v1090, %v1031
        %v1092 = vadd.f32 %v1091, %v1034
        %v1093 = vadd.f32 %v1092, %v1037
        %v1094 = vadd.f32 %v1093, %v1040
        %v1095 = vadd.f32 %v1094, %v1043
        %v1096 = vadd.f32 %v1095, %v1046
        %v1097 = vadd.f32 %v1096, %v1049
        %v1098 = vrot.slane %v1097, 4
        %v1099 = vadd.f32 %v1097, %v1098
        %v1100 = vrot.slane %v1099, 2
        %v1101 = vadd.f32 %v1099, %v1100
        %v1102 = vrot.slane %v1101, 1
        %v1103 = vadd.f32 %v1101, %v1102
        %1104 = vst [vmem:[%s224] sm:$0x1] %v1103
        %v1105 = vmul.f32 %v1004, %v1004
        %v1106 = vmul.f32 %v1007, %v1007
        %v1107 = vmul.f32 %v1010, %v1010
        %v1108 = vmul.f32 %v1013, %v1013
        %v1109 = vmul.f32 %v1016, %v1016
        %v1110 = vmul.f32 %v1019, %v1019
        %v1111 = vmul.f32 %v1022, %v1022
        %v1112 = vmul.f32 %v1025, %v1025
        %v1113 = vmul.f32 %v1028, %v1028
        %v1114 = vmul.f32 %v1031, %v1031
        %v1115 = vmul.f32 %v1034, %v1034
        %v1116 = vmul.f32 %v1037, %v1037
        %v1117 = vmul.f32 %v1040, %v1040
        %v1118 = vmul.f32 %v1043, %v1043
        %v1119 = vmul.f32 %v1046, %v1046
        %v1120 = vmul.f32 %v1049, %v1049
        %v1121 = vadd.f32 %v1105, %v1106
        %v1122 = vadd.f32 %v1121, %v1107
        %v1123 = vadd.f32 %v1122, %v1108
        %v1124 = vadd.f32 %v1123, %v1109
        %v1125 = vadd.f32 %v1124, %v1110
        %v1126 = vadd.f32 %v1125, %v1111
        %v1127 = vadd.f32 %v1126, %v1112
        %v1128 = vadd.f32 %v1127, %v1113
        %v1129 = vadd.f32 %v1128, %v1114
        %v1130 = vadd.f32 %v1129, %v1115
        %v1131 = vadd.f32 %v1130, %v1116
        %v1132 = vadd.f32 %v1131, %v1117
        %v1133 = vadd.f32 %v1132, %v1118
        %v1134 = vadd.f32 %v1133, %v1119
        %v1135 = vadd.f32 %v1134, %v1120
        %v1136 = vrot.slane %v1135, 4
        %v1137 = vadd.f32 %v1135, %v1136
        %v1138 = vrot.slane %v1137, 2
        %v1139 = vadd.f32 %v1137, %v1138
        %v1140 = vrot.slane %v1139, 1
        %v1141 = vadd.f32 %v1139, %v1140
        %1142 = vst [vmem:[%s230] sm:$0x1] %v1141
        %s1143 = sand.u32 %s93, 1
        %s1144 = scalar_lea.sflag [#allocation3], %s1143
        %s1145 = sand.u32 %s93, 1
        %s1146 = smul.addr %s1145, 64
        %s1147 = scalar_lea.vmem [#allocation2], %s1146
        %s1148 = sand.u32 %s22, 1
        %s1149 = scalar_lea.sflag [#allocation5], %s1148
        %s1150 = sand.u32 %s123, 1
        %s1151 = scalar_lea.vmem [#allocation4], %s1150
        %s1152 = sand.u32 %s22, 1
        %s1153 = scalar_lea.sflag [#allocation5], %s1152
        %s1154 = sand.u32 %s153, 1
        %s1155 = scalar_lea.vmem [#allocation6], %s1154
        // Predicated region
        $region29: #{tpu_custom_call.1} parent=27 // pred_check
          %p1156 = pneg %p103
        $region30: #{tpu_custom_call.1} parent=27 // pred_check_branch
          %1158 = sbr.rel (%p1156) target = $region32
        $region31: #{tpu_custom_call.1} parent=27 // pred_region
          %s1159 = smul.u32 %s26, 2
          %s1160 = sadd.s32 %s1159, %s27
          %s1161 = smul.u32 16, %s1160
          %1163 = vsyncadd %s1144, 0
          %s1164 = smul.addr %s1161, 4
          %s1165 = scalar_lea.hbm %s2, %s1164
          %s1166 = sshll.u32 %s1147, 4
          %s1167 = int_to_ptr.vmem [resolvable:$true] %s1166
          %s1168 = sshll.u32 %s1165, 4
          %s1169 = int_to_ptr.hbm [resolvable:$true] %s1168
          %1174 = dma.vmem_to_hbm [thread:$0]  %s1167, 1024, %s1169, %s1144, 64, 64, 4
        $region32: #{tpu_custom_call.1} parent=27 // pred_fallthru
          _
        // Predicated region
        $region33: #{tpu_custom_call.1} parent=27 // pred_check
          %p1175 = pneg %p133
        $region34: #{tpu_custom_call.1} parent=27 // pred_check_branch
          %1177 = sbr.rel (%p1175) target = $region36
        $region35: #{tpu_custom_call.1} parent=27 // pred_region
          %s1178 = smul.u32 %s26, 2
          %s1179 = sadd.s32 %s1178, %s27
          %1181 = vsyncadd %s1149, 0
          %s1182 = scalar_lea.hbm %s3, %s1179
          %s1184 = sshll.u32 %s1151, 4
          %s1185 = int_to_ptr.vmem [resolvable:$true] %s1184
          %s1186 = sshll.u32 %s1182, 4
          %s1187 = int_to_ptr.hbm [resolvable:$true] %s1186
          %1189 = dma.vmem_to_hbm [thread:$0]  %s1185, 16, %s1187, %s1149
        $region36: #{tpu_custom_call.1} parent=27 // pred_fallthru
          _
        // Predicated region
        $region37: #{tpu_custom_call.1} parent=27 // pred_check
          %p1190 = pneg %p163
        $region38: #{tpu_custom_call.1} parent=27 // pred_check_branch
          %1192 = sbr.rel (%p1190) target = $region40
        $region39: #{tpu_custom_call.1} parent=27 // pred_region
          %s1193 = smul.u32 %s26, 2
          %s1194 = sadd.s32 %s1193, %s27
          %1196 = vsyncadd %s1153, 0
          %s1197 = scalar_lea.hbm %s4, %s1194
          %s1199 = sshll.u32 %s1155, 4
          %s1200 = int_to_ptr.vmem [resolvable:$true] %s1199
          %s1201 = sshll.u32 %s1197, 4
          %s1202 = int_to_ptr.hbm [resolvable:$true] %s1201
          %1204 = dma.vmem_to_hbm [thread:$0]  %s1200, 16, %s1202, %s1153
        $region40: #{tpu_custom_call.1} parent=27 // pred_fallthru
          _
      $region28: #{tpu_custom_call.1} parent=5 // pred_fallthru
        _
      %p1205 = scmp.le.s32.totalorder 2, %s17
      // Predicated region
      $region41: #{tpu_custom_call.1} parent=5 // pred_check
        %p1206 = pneg %p1205
      $region42: #{tpu_custom_call.1} parent=5 // pred_check_branch
        %1208 = sbr.rel (%p1206) target = $region44
      $region43: #{tpu_custom_call.1} parent=5 // pred_region
        %s1209 = ssub.s32 %s17, 2
        // Predicated region
        $region45: #{tpu_custom_call.1} parent=43 // pred_check
          %p1210 = pneg %p109
        $region46: #{tpu_custom_call.1} parent=43 // pred_check_branch
          %1212 = sbr.rel (%p1210) target = $region48
        $region47: #{tpu_custom_call.1} parent=43 // pred_region
          %s1213 = sand.u32 %s94, 1
          %s1214 = scalar_lea.sflag [#allocation3], %s1213
          %s1215 = sand.u32 %s94, 1
          %s1216 = smul.addr %s1215, 64
          %s1217 = scalar_lea.vmem [#allocation2], %s1216
          %1219 = dma.done %s1214, 1024
        $region48: #{tpu_custom_call.1} parent=43 // pred_fallthru
          _
        // Predicated region
        $region49: #{tpu_custom_call.1} parent=43 // pred_check
          %p1220 = pneg %p139
        $region50: #{tpu_custom_call.1} parent=43 // pred_check_branch
          %1222 = sbr.rel (%p1220) target = $region52
        $region51: #{tpu_custom_call.1} parent=43 // pred_region
          %s1223 = sand.u32 %s23, 1
          %s1224 = scalar_lea.sflag [#allocation5], %s1223
          %s1225 = sand.u32 %s124, 1
          %s1226 = scalar_lea.vmem [#allocation4], %s1225
          %1228 = dma.done %s1224, 16
        $region52: #{tpu_custom_call.1} parent=43 // pred_fallthru
          _
        // Predicated region
        $region53: #{tpu_custom_call.1} parent=43 // pred_check
          %p1229 = pneg %p169
        $region54: #{tpu_custom_call.1} parent=43 // pred_check_branch
          %1231 = sbr.rel (%p1229) target = $region56
        $region55: #{tpu_custom_call.1} parent=43 // pred_region
          %s1232 = sand.u32 %s23, 1
          %s1233 = scalar_lea.sflag [#allocation5], %s1232
          %s1234 = sand.u32 %s154, 1
          %s1235 = scalar_lea.vmem [#allocation6], %s1234
          %1237 = dma.done %s1233, 16
        $region56: #{tpu_custom_call.1} parent=43 // pred_fallthru
          _
      $region44: #{tpu_custom_call.1} parent=5 // pred_fallthru
        _
    $region6: #{tpu_custom_call.1} parent=1 // loop_footer
      %s21 = sadd.s32 1, %s17
    $region7: #{tpu_custom_call.1} parent=1 // loop_footer_branch
      %16 = sbr.rel target = $region3
    $region8: #{tpu_custom_call.1} parent=1 // loop_exit
      _
    %1238 = vsyncpa [#allocation3], 1
    %s1239 = scalar_lea.sflag [#allocation3], 1
    %1240 = vsyncpa %s1239, 1
    %1241 = vsyncpa [#allocation5], 1
    %s1242 = scalar_lea.sflag [#allocation5], 1
    %1243 = vsyncpa %s1242, 1

</llo_original>
